<compile_context>
chip_gen: v7x
topology: tpu7x:2x2x1
jax: 0.10.0
libtpu: 0.0.40
codegen_flags: <defaults>
</compile_context>

<pallas_src>
import jax
import jax.numpy as jnp
import numpy as np
from jax.experimental import pallas as pl
from jax.experimental.pallas import tpu as pltpu

LANE = 128


def _round_up(v, m):
    return (v + m - 1) // m * m


def _pick_tile(n_pad):
    """Largest tile in {512, 256, 128} dividing n_pad.

    Double-buffered (tile, tile) f32 A_hat^T block: 2*512*512*4 = 2 MiB,
    comfortably inside scoped VMEM on every chip generation.
    """
    for cand in (512, 256, 128):
        if n_pad % cand == 0:
            return cand
    return LANE


# ----------------------------- Pallas kernels ------------------------------ #
def feat_kernel(xt_ref, wt_ref, ht_ref):
    # h^T tile = W^T @ x^T[:, tile] : (1, F) @ (F, TN) -> (1, TN)
    ht_ref[...] = jnp.dot(wt_ref[...], xt_ref[...],
                          preferred_element_type=jnp.float32)


def agg_kernel(ht_ref, at_ref, b_ref, o_ref, acc_ref):
    # out^T[:, j-tile] = sum_k h^T[:, k-tile] @ A_hat^T[k-tile, j-tile] + b
    k = pl.program_id(1)

    @pl.when(k == 0)
    def _():
        acc_ref[...] = jnp.zeros_like(acc_ref)

    acc_ref[...] += jnp.dot(ht_ref[...], at_ref[...],
                            preferred_element_type=jnp.float32)

    @pl.when(k == pl.num_programs(1) - 1)
    def _():
        o_ref[...] = acc_ref[...] + b_ref[0]


# ------------------------------ Pallas wrappers ----------------------------- #
def feat_transform_pallas(x_t, w_t, tile):
    f, n_pad = x_t.shape
    return pl.pallas_call(
        feat_kernel,
        out_shape=jax.ShapeDtypeStruct((1, n_pad), jnp.float32),
        grid=(n_pad // tile,),
        in_specs=[
            pl.BlockSpec((f, tile), lambda j: (0, j)),   # x^T column tile
            pl.BlockSpec((1, f), lambda j: (0, 0)),      # W^T (resident)
        ],
        out_specs=pl.BlockSpec((1, tile), lambda j: (0, j)),
        compiler_params=pltpu.CompilerParams(
            dimension_semantics=("parallel",),
            vmem_limit_bytes=32 * 1024 * 1024,
        ),
    )(x_t, w_t)


def gcn_aggregate_pallas(h_t, a_hat_t, b, tile):
    n_pad = a_hat_t.shape[0]
    nt = n_pad // tile
    return pl.pallas_call(
        agg_kernel,
        out_shape=jax.ShapeDtypeStruct((1, n_pad), jnp.float32),
        grid=(nt, nt),                                    # (out cols, reduction)
        in_specs=[
            pl.BlockSpec((1, tile), lambda j, k: (0, k)),      # h^T reduction slice
            pl.BlockSpec((tile, tile), lambda j, k: (k, j)),   # A_hat^T tile
            pl.BlockSpec(memory_space=pltpu.SMEM),             # bias scalar
        ],
        out_specs=pl.BlockSpec((1, tile), lambda j, k: (0, j)),
        scratch_shapes=[pltpu.VMEM((1, tile), jnp.float32)],
        compiler_params=pltpu.CompilerParams(
            dimension_semantics=("parallel", "arbitrary"),     # megacore on j
            vmem_limit_bytes=32 * 1024 * 1024,
        ),
    )(h_t, a_hat_t, b)


# --------------------------------- JAX glue --------------------------------- #
def build_normalized_adjacency_t(edge_index, num_nodes, n_pad):
    """Dense (D^{-1/2}(A + I)D^{-1/2})^T, zero-padded to (n_pad, n_pad).

    Matches PyG gcn_norm: self loops added before degree, duplicate edges sum.
    """
    # TODO(synk): for large graphs replace this dense O(N^2) matrix with a CSR
    # sparse aggregation inside the kernel (scalar-prefetched row offsets /
    # column indices / deg^{-1/2}).
    src = edge_index[0]
    dst = edge_index[1]
    loop = jnp.arange(num_nodes, dtype=edge_index.dtype)
    src = jnp.concatenate([src, loop])
    dst = jnp.concatenate([dst, loop])
    # A^T[j, i] accumulates edges j -> i.
    a_t = jnp.zeros((n_pad, n_pad), jnp.float32).at[src, dst].add(1.0)
    deg = a_t.sum(axis=0)                       # deg[i] = row sum of A
    dinv = jnp.where(deg > 0, 1.0 / jnp.sqrt(deg), 0.0)
    # Symmetric normalization: A_hat^T = D^{-1/2} A^T D^{-1/2}.
    return dinv[:, None] * a_t * dinv[None, :]


@jax.jit
def gnn_rr_forward(x, edge_index, w, b):
    n, f = x.shape
    n_pad = _round_up(max(n, LANE), LANE)
    tile = _pick_tile(n_pad)
    a_hat_t = build_normalized_adjacency_t(edge_index, n, n_pad)
    x_t = jnp.zeros((f, n_pad), jnp.float32).at[:, :n].set(
        x.astype(jnp.float32).T)
    w_t = w.astype(jnp.float32).T                       # (1, f)
    h_t = feat_transform_pallas(x_t, w_t, tile)         # (1, n_pad)
    b_s = b.astype(jnp.float32).reshape(1)              # SMEM scalar
    out_t = gcn_aggregate_pallas(h_t, a_hat_t, b_s, tile)  # (1, n_pad), lane-dense
    return out_t[0, :n].reshape(n, 1)


class GNN_RR_Pallas:
    """GNN_RR: conv1 = GCNConv(d - 1, 1)."""

    def __init__(self, d, key):
        in_ch, out_ch = d - 1, 1
        # Glorot-uniform (matches PyG GCNConv lin init), bias zeros.
        limit = float(np.sqrt(6.0 / (in_ch + out_ch)))
        self.weight = jax.random.uniform(
            key, (in_ch, out_ch), jnp.float32, minval=-limit, maxval=limit)
        self.bias = jnp.zeros((out_ch,), jnp.float32)

    def __call__(self, x, edge_index):
        return gnn_rr_forward(x, edge_index, self.weight, self.bias)


# ----------------------------------- main ----------------------------------- #
if __name__ == "__main__":
    key = jax.random.PRNGKey(0)
    k_x, k_e1, k_e2, k_w = jax.random.split(key, 4)

    N = 64          # number of graph nodes
    d = 33          # module arg -> in_channels = d - 1 = 32
    E = 128         # number of directed edges

    x = jax.random.normal(k_x, (N, d - 1), jnp.float32)
    src = jax.random.randint(k_e1, (E,), 0, N, dtype=jnp.int32)
    dst = jax.random.randint(k_e2, (E,), 0, N, dtype=jnp.int32)
    edge_index = jnp.stack([src, dst], axis=0)  # (2, E)

    model = GNN_RR_Pallas(d, k_w)
    out = jax.block_until_ready(model(x, edge_index))
    assert out.shape == (N, 1)

    # float64 numpy reference of the exact GCNConv semantics.
    xn = np.asarray(x, np.float64)
    wn = np.asarray(model.weight, np.float64)
    bn = np.asarray(model.bias, np.float64)
    sn, dn = np.asarray(src), np.asarray(dst)
    a = np.zeros((N, N), np.float64)
    np.add.at(a, (dn, sn), 1.0)                 # A[i, j] += 1 for edge j -> i
    a[np.arange(N), np.arange(N)] += 1.0        # self loops
    deg = a.sum(axis=1)
    dinv = np.where(deg > 0, 1.0 / np.sqrt(deg), 0.0)
    a_hat = dinv[:, None] * a * dinv[None, :]
    ref = a_hat @ (xn @ wn) + bn[None, :]

    np.testing.assert_allclose(np.asarray(out), ref, rtol=1e-4, atol=1e-4)
    print("KERNEL_OK")
</pallas_src>

<mosaic_0001>
module attributes {stable_mosaic.version = 11 : i64} {
  func.func private @main(%arg0: i32) attributes {dimension_semantics = [#tpu.dimension_semantics<core_parallel>], iteration_bounds = array<i64: 2>, tpu.core_type = #tpu.core_type<sc_scalar_subcore>, window_params = []} {
    return
  }
}

module attributes {stable_mosaic.version = 11 : i64} {
  func.func private @main(%arg0: i32) attributes {dimension_semantics = [#tpu.dimension_semantics<core_parallel>], iteration_bounds = array<i64: 2>, tpu.core_type = #tpu.core_type<sc_scalar_subcore>, window_params = []} {
    return
  }
}

module attributes {stable_mosaic.version = 11 : i64} {
  func.func @feat_kernel(%arg0: i32, %arg1: memref<32x128xf32, #tpu.memory_space<vmem>>, %arg2: memref<1x32xf32, #tpu.memory_space<vmem>>, %arg3: memref<1x128xf32, #tpu.memory_space<vmem>>) attributes {dimension_semantics = [#tpu.dimension_semantics<parallel>], iteration_bounds = array<i64: 1>, scalar_prefetch = 0 : i64, scratch_operands = 0 : i64, tpu.core_type = #tpu.core_type<tc>, window_params = [{transform_indices = @transform_0, window_bounds = array<i64: 32, 128>}, {pipeline_mode = #tpu.pipeline_mode<synchronous>, transform_indices = @transform_1, window_bounds = array<i64: 1, 32>}, {transform_indices = @transform_2, window_bounds = array<i64: 1, 128>}]} {
    %c0 = arith.constant 0 : index
    %c0_0 = arith.constant 0 : index
    %0 = vector.load %arg2[%c0, %c0_0] : memref<1x32xf32, #tpu.memory_space<vmem>>, vector<1x32xf32>
    %c0_1 = arith.constant 0 : index
    %c0_2 = arith.constant 0 : index
    %1 = vector.load %arg1[%c0_1, %c0_2] : memref<32x128xf32, #tpu.memory_space<vmem>>, vector<32x128xf32>
    %cst = arith.constant dense<0.000000e+00> : vector<1x128xf32>
    %2 = tpu.matmul %0, %1, %cst {dimension_numbers = #tpu.dot_dimension_numbers<[1], [0], [0], [1], [0, 0, 1, 1], [], []>} : vector<1x32xf32>, vector<32x128xf32>, vector<1x128xf32> -> vector<1x128xf32>
    %c0_3 = arith.constant 0 : index
    %c0_4 = arith.constant 0 : index
    %3 = vector.load %arg3[%c0_3, %c0_4] : memref<1x128xf32, #tpu.memory_space<vmem>>, vector<1x128xf32>
    tpu.vector_store %arg3[%c0_3, %c0_4], %2 {strides = array<i32>} : memref<1x128xf32, #tpu.memory_space<vmem>>, vector<1x128xf32>,
    return
  }
  func.func @transform_0(%arg0: i32) -> (i32, i32) {
    %c0_i32 = arith.constant 0 : i32
    %c0_i32_0 = arith.constant 0 : i32
    return %c0_i32, %arg0 : i32, i32
  }
  func.func @transform_1(%arg0: i32) -> (i32, i32) {
    %c0_i32 = arith.constant 0 : i32
    %c0_i32_0 = arith.constant 0 : i32
    %c0_i32_1 = arith.constant 0 : i32
    return %c0_i32, %c0_i32_0 : i32, i32
  }
  func.func @transform_2(%arg0: i32) -> (i32, i32) {
    %c0_i32 = arith.constant 0 : i32
    %c0_i32_0 = arith.constant 0 : i32
    return %c0_i32, %arg0 : i32, i32
  }
}

module attributes {stable_mosaic.version = 11 : i64} {
  func.func @agg_kernel(%arg0: i32, %arg1: i32, %arg2: memref<1x128xf32, #tpu.memory_space<vmem>>, %arg3: memref<128x128xf32, #tpu.memory_space<vmem>>, %arg4: memref<1xf32, #tpu.memory_space<smem>>, %arg5: memref<1x128xf32, #tpu.memory_space<vmem>>, %arg6: memref<1x128xf32, #tpu.memory_space<vmem>>) attributes {dimension_semantics = [#tpu.dimension_semantics<parallel>, #tpu.dimension_semantics<arbitrary>], iteration_bounds = array<i64: 1, 1>, scalar_prefetch = 0 : i64, scratch_operands = 1 : i64, tpu.core_type = #tpu.core_type<tc>, window_params = [{transform_indices = @transform_0, window_bounds = array<i64: 1, 128>}, {transform_indices = @transform_1, window_bounds = array<i64: 128, 128>}, {transform_indices = @transform_2, window_bounds = array<i64: 1>}, {transform_indices = @transform_3, window_bounds = array<i64: 1, 128>}]} {
    %c0_i32 = arith.constant 0 : i32
    %0 = arith.cmpi eq, %arg1, %c0_i32 : i32
    %1 = arith.extui %0 : i1 to i32
    %c0_i32_0 = arith.constant 0 : i32
    %2 = arith.cmpi ne, %1, %c0_i32_0 : i32
    scf.if %2 {
      %cst_10 = arith.constant 0.000000e+00 : f32
      %12 = vector.broadcast %cst_10 : f32 to vector<1x128xf32>
      %c0_11 = arith.constant 0 : index
      %c0_12 = arith.constant 0 : index
      %13 = vector.load %arg6[%c0_11, %c0_12] : memref<1x128xf32, #tpu.memory_space<vmem>>, vector<1x128xf32>
      tpu.vector_store %arg6[%c0_11, %c0_12], %12 {strides = array<i32>} : memref<1x128xf32, #tpu.memory_space<vmem>>, vector<1x128xf32>,
    } else {
    }
    %c0 = arith.constant 0 : index
    %c0_1 = arith.constant 0 : index
    %3 = vector.load %arg6[%c0, %c0_1] : memref<1x128xf32, #tpu.memory_space<vmem>>, vector<1x128xf32>
    %c0_2 = arith.constant 0 : index
    %c0_3 = arith.constant 0 : index
    %4 = vector.load %arg2[%c0_2, %c0_3] : memref<1x128xf32, #tpu.memory_space<vmem>>, vector<1x128xf32>
    %c0_4 = arith.constant 0 : index
    %c0_5 = arith.constant 0 : index
    %5 = vector.load %arg3[%c0_4, %c0_5] : memref<128x128xf32, #tpu.memory_space<vmem>>, vector<128x128xf32>
    %cst = arith.constant dense<0.000000e+00> : vector<1x128xf32>
    %6 = tpu.matmul %4, %5, %cst {dimension_numbers = #tpu.dot_dimension_numbers<[1], [0], [0], [1], [0, 0, 1, 1], [], []>} : vector<1x128xf32>, vector<128x128xf32>, vector<1x128xf32> -> vector<1x128xf32>
    %7 = arith.addf %3, %6 : vector<1x128xf32>
    %c0_6 = arith.constant 0 : index
    %c0_7 = arith.constant 0 : index
    %8 = vector.load %arg6[%c0_6, %c0_7] : memref<1x128xf32, #tpu.memory_space<vmem>>, vector<1x128xf32>
    tpu.vector_store %arg6[%c0_6, %c0_7], %7 {strides = array<i32>} : memref<1x128xf32, #tpu.memory_space<vmem>>, vector<1x128xf32>,
    %c0_i32_8 = arith.constant 0 : i32
    %9 = arith.cmpi eq, %arg1, %c0_i32_8 : i32
    %10 = arith.extui %9 : i1 to i32
    %c0_i32_9 = arith.constant 0 : i32
    %11 = arith.cmpi ne, %10, %c0_i32_9 : i32
    scf.if %11 {
      %c0_10 = arith.constant 0 : index
      %c0_11 = arith.constant 0 : index
      %12 = vector.load %arg6[%c0_10, %c0_11] : memref<1x128xf32, #tpu.memory_space<vmem>>, vector<1x128xf32>
      %c0_12 = arith.constant 0 : index
      %13 = memref.load %arg4[%c0_12] : memref<1xf32, #tpu.memory_space<smem>>
      %14 = vector.broadcast %13 : f32 to vector<1x128xf32>
      %15 = arith.addf %12, %14 : vector<1x128xf32>
      %c0_13 = arith.constant 0 : index
      %c0_14 = arith.constant 0 : index
      %16 = vector.load %arg5[%c0_13, %c0_14] : memref<1x128xf32, #tpu.memory_space<vmem>>, vector<1x128xf32>
      tpu.vector_store %arg5[%c0_13, %c0_14], %15 {strides = array<i32>} : memref<1x128xf32, #tpu.memory_space<vmem>>, vector<1x128xf32>,
    } else {
    }
    return
  }
  func.func @transform_0(%arg0: i32, %arg1: i32) -> (i32, i32) {
    %c0_i32 = arith.constant 0 : i32
    %c0_i32_0 = arith.constant 0 : i32
    return %c0_i32, %arg1 : i32, i32
  }
  func.func @transform_1(%arg0: i32, %arg1: i32) -> (i32, i32) {
    %c0_i32 = arith.constant 0 : i32
    return %arg1, %arg0 : i32, i32
  }
  func.func @transform_2(%arg0: i32, %arg1: i32) -> i32 {
    %c0_i32 = arith.constant 0 : i32
    %c0_i32_0 = arith.constant 0 : i32
    return %c0_i32 : i32
  }
  func.func @transform_3(%arg0: i32, %arg1: i32) -> (i32, i32) {
    %c0_i32 = arith.constant 0 : i32
    %c0_i32_0 = arith.constant 0 : i32
    return %c0_i32, %arg0 : i32, i32
  }
}

</mosaic_0001>

<llo_original>
// kernel: gnn_rr_forward.2
$region0: #{gnn_rr_forward.2}
  #allocation0 [shape = 'u32[]', space=smem, size = 0x4, offset = 0x4, fixed_abs, tag = 'smem constant byte address 0x4 - core index']
  #allocation1 [shape = 'u32[144,128]{1,0:T(1,128)}', space=vmem, size = 0x12000, scoped, tag = 'internal scratch']
  %s0 = inlined_call_operand.vmem [shape: f32[32,128], index: 0, kind: input, shape index: {}]
  %s1 = inlined_call_operand.vmem [shape: f32[1,32], index: 1, kind: input, shape index: {}]
  %s2 = inlined_call_operand.vmem [shape: f32[1,128], index: 2, kind: output, shape index: {}]
  %s3 = sld [smem:[#allocation0]]
  $region18: #{gnn_rr_forward.2} parent=0
    _
  %s5 = ssub.s32 1, %s3
  %s6 = scalar_select 0, %s5, %s3
  // Predicated region
  $region2: #{gnn_rr_forward.2} parent=0 // pred_check
    _
  $region3: #{gnn_rr_forward.2} parent=0 // pred_check_branch
    %8 = sbr.rel (0) target = $region5
  $region4: #{gnn_rr_forward.2} parent=0 // pred_region
    _
  $region5: #{gnn_rr_forward.2} parent=0 // pred_fallthru
    _
  // Predicated region
  $region6: #{gnn_rr_forward.2} parent=0 // pred_check
    _
  $region7: #{gnn_rr_forward.2} parent=0 // pred_check_branch
    %10 = sbr.rel (0) target = $region9
  $region8: #{gnn_rr_forward.2} parent=0 // pred_region
    _
  $region9: #{gnn_rr_forward.2} parent=0 // pred_fallthru
    _
  %v11 = vld [vmem:[%s1] sm:$0x1]
  %v12 = vld [vmem:[%s0] sm:$0xff]
  %v13 = vld [vmem:[%s0 + $0x8] sm:$0xff]
  %v14 = vld [vmem:[%s0 + $0x10] sm:$0xff]
  %v15 = vld [vmem:[%s0 + $0x18] sm:$0xff]
  %vm16 = vcmask 261120
  %v18 = vsel %vm16, %v11, 0
  %20 = vmatprep.subr.mxu0 0.0
  %21 = vmatpush1.msra.mxu0 %v12
  %22 = vmatprep.subr.mxu0 0.0
  %23 = vmatpush1.msra.mxu0 %v13
  %24 = vmatprep.subr.mxu0 0.0
  %25 = vmatpush1.msra.mxu0 %v14
  %26 = vmatprep.subr.mxu0 0.0
  %27 = vmatpush1.msra.mxu0 %v15
  %28 = vmatprep.subr.mxu0 0.0
  %29 = vmatpush1.msra.mxu0 0.0
  %30 = vmatprep.subr.mxu0 0.0
  %31 = vmatpush1.msra.mxu0 0.0
  %32 = vmatprep.subr.mxu0 0.0
  %33 = vmatpush1.msra.mxu0 0.0
  %34 = vmatprep.subr.mxu0 0.0
  %35 = vmatpush1.msra.mxu0 0.0
  %36 = vmatprep.subr.mxu0 0.0
  %37 = vmatpush1.msra.mxu0 0.0
  %38 = vmatprep.subr.mxu0 0.0
  %39 = vmatpush1.msra.mxu0 0.0
  %40 = vmatprep.subr.mxu0 0.0
  %41 = vmatpush1.msra.mxu0 0.0
  %42 = vmatprep.subr.mxu0 0.0
  %43 = vmatpush1.msra.mxu0 0.0
  %44 = vmatprep.subr.mxu0 0.0
  %45 = vmatpush1.msra.mxu0 0.0
  %46 = vmatprep.subr.mxu0 0.0
  %47 = vmatpush1.msra.mxu0 0.0
  %48 = vmatprep.subr.mxu0 0.0
  %49 = vmatpush1.msra.mxu0 0.0
  %50 = vmatprep.subr.mxu0 0.0
  %51 = vmatpush1.msra.mxu0 0.0
  %52 = vmatprep.subr.mxu0 0.0
  %53 = vmatpush1.msra.mxu0 0.0
  %54 = vmatprep.subr.mxu0 0.0
  %55 = vmatpush1.msra.mxu0 0.0
  %56 = vmatprep.subr.mxu0 0.0
  %57 = vmatpush1.msra.mxu0 0.0
  %58 = vmatprep.subr.mxu0 0.0
  %59 = vmatpush1.msra.mxu0 0.0
  %60 = vmatprep.subr.mxu0 0.0
  %61 = vmatpush1.msra.mxu0 0.0
  %62 = vmatprep.subr.mxu0 0.0
  %63 = vmatpush1.msra.mxu0 0.0
  %64 = vmatprep.subr.mxu0 0.0
  %65 = vmatpush1.msra.mxu0 0.0
  %66 = vmatprep.subr.mxu0 0.0
  %67 = vmatpush1.msra.mxu0 0.0
  %68 = vmatprep.subr.mxu0 0.0
  %69 = vmatpush1.msra.mxu0 0.0
  %70 = vmatprep.subr.mxu0 0.0
  %71 = vmatpush1.msra.mxu0 0.0
  %72 = vmatprep.subr.mxu0 0.0
  %73 = vmatpush1.msra.mxu0 0.0
  %74 = vmatprep.subr.mxu0 0.0
  %75 = vmatpush1.msra.mxu0 0.0
  %76 = vmatprep.subr.mxu0 0.0
  %77 = vmatpush1.msra.mxu0 0.0
  %78 = vmatprep.subr.mxu0 0.0
  %79 = vmatpush1.msra.mxu0 0.0
  %80 = vmatprep.subr.mxu0 0.0
  %81 = vmatpush1.msra.mxu0 0.0
  %82 = vmatprep.subr.mxu0 0.0
  %83 = vmatpush1.msra.mxu0 0.0
  %84 = vmatprep.mubr.f32.mxu0 0.0
  %85 = vmatmul.mubr.f32.gmra.mrb[0].mxu0 %v18
  %v86 = vpop.f32.mrb[0].mxu0
  %v87 = vadd.f32 0.0, %v86
  %v88 = vpop.f32.mrb[0].mxu0
  %89 = vdwg.mxu0
  %90 = vst [vmem:[%s2] sm:$0x1] %v87
  // Predicated region
  $region10: #{gnn_rr_forward.2} parent=0 // pred_check
    _
  $region11: #{gnn_rr_forward.2} parent=0 // pred_check_branch
    %92 = sbr.rel (0) target = $region13
  $region12: #{gnn_rr_forward.2} parent=0 // pred_region
    _
  $region13: #{gnn_rr_forward.2} parent=0 // pred_fallthru
    _
  // Predicated region
  $region14: #{gnn_rr_forward.2} parent=0 // pred_check
    _
  $region15: #{gnn_rr_forward.2} parent=0 // pred_check_branch
    %94 = sbr.rel (0) target = $region17
  $region16: #{gnn_rr_forward.2} parent=0 // pred_region
    _
  $region17: #{gnn_rr_forward.2} parent=0 // pred_fallthru
    _

// kernel: gnn_rr_forward.3
$region0: #{gnn_rr_forward.3}
  #allocation0 [shape = 'u32[]', space=smem, size = 0x4, offset = 0x4, fixed_abs, tag = 'smem constant byte address 0x4 - core index']
  #allocation1 [shape = 'u32[144,128]{1,0:T(1,128)}', space=vmem, size = 0x12000, scoped, tag = 'internal scratch']
  #allocation2 [shape = 'f32[1,128]{1,0:T(1,128)}', space=vmem, size = 0x200, scoped, tag = 'scratch operand']
  #allocation3 [shape = 'f32[1]{0:T(128)S(6)}', space=smem, size = 0x200, scoped, tag = 'scoped memory for gnn_rr_forward.3']
  %s0 = inlined_call_operand.vmem [shape: f32[1,128], index: 0, kind: input, shape index: {}]
  %s1 = inlined_call_operand.vmem [shape: f32[128,128], index: 1, kind: input, shape index: {}]
  %s2 = inlined_call_operand.<no memory space> [shape: f32[1], index: 2, kind: input, shape index: {}]
  %s3 = inlined_call_operand.vmem [shape: f32[1,128], index: 3, kind: output, shape index: {}]
  %s4 = sld [smem:[#allocation0]]
  $region30: #{gnn_rr_forward.3} parent=0
    _
  %s6 = ssub.s32 1, %s4
  %s7 = scalar_select 0, %s6, %s4
  %8 = sst [smem:[#allocation3]] %s2
  // Predicated region
  $region2: #{gnn_rr_forward.3} parent=0 // pred_check
    _
  $region3: #{gnn_rr_forward.3} parent=0 // pred_check_branch
    %10 = sbr.rel (0) target = $region5
  $region4: #{gnn_rr_forward.3} parent=0 // pred_region
    _
  $region5: #{gnn_rr_forward.3} parent=0 // pred_fallthru
    _
  // Predicated region
  $region6: #{gnn_rr_forward.3} parent=0 // pred_check
    _
  $region7: #{gnn_rr_forward.3} parent=0 // pred_check_branch
    %12 = sbr.rel (0) target = $region9
  $region8: #{gnn_rr_forward.3} parent=0 // pred_region
    _
  $region9: #{gnn_rr_forward.3} parent=0 // pred_fallthru
    _
  // Predicated region
  $region10: #{gnn_rr_forward.3} parent=0 // pred_check
    _
  $region11: #{gnn_rr_forward.3} parent=0 // pred_check_branch
    %14 = sbr.rel (0) target = $region13
  $region12: #{gnn_rr_forward.3} parent=0 // pred_region
    _
  $region13: #{gnn_rr_forward.3} parent=0 // pred_fallthru
    _
  %p15 = scmp.eq.s32.totalorder 0, 0
  // Predicated region
  $region14: #{gnn_rr_forward.3} parent=0 // pred_check
    %p16 = pneg %p15
  $region15: #{gnn_rr_forward.3} parent=0 // pred_check_branch
    %18 = sbr.rel (%p16) target = $region17
  $region16: #{gnn_rr_forward.3} parent=0 // pred_region
    %19 = vst [vmem:[#allocation2] sm:$0x1] 0.0
  $region17: #{gnn_rr_forward.3} parent=0 // pred_fallthru
    _
  %v20 = vld [vmem:[#allocation2] sm:$0x1]
  %v21 = vld [vmem:[%s0] sm:$0x1]
  %v22 = vld [vmem:[%s1] sm:$0xff]
  %v23 = vld [vmem:[%s1 + $0x8] sm:$0xff]
  %v24 = vld [vmem:[%s1 + $0x10] sm:$0xff]
  %v25 = vld [vmem:[%s1 + $0x18] sm:$0xff]
  %v26 = vld [vmem:[%s1 + $0x20] sm:$0xff]
  %v27 = vld [vmem:[%s1 + $0x28] sm:$0xff]
  %v28 = vld [vmem:[%s1 + $0x30] sm:$0xff]
  %v29 = vld [vmem:[%s1 + $0x38] sm:$0xff]
  %v30 = vld [vmem:[%s1 + $0x40] sm:$0xff]
  %v31 = vld [vmem:[%s1 + $0x48] sm:$0xff]
  %v32 = vld [vmem:[%s1 + $0x50] sm:$0xff]
  %v33 = vld [vmem:[%s1 + $0x58] sm:$0xff]
  %v34 = vld [vmem:[%s1 + $0x60] sm:$0xff]
  %v35 = vld [vmem:[%s1 + $0x68] sm:$0xff]
  %v36 = vld [vmem:[%s1 + $0x70] sm:$0xff]
  %v37 = vld [vmem:[%s1 + $0x78] sm:$0xff]
  %38 = vmatprep.subr.mxu0 0.0
  %39 = vmatpush1.msra.mxu0 %v22
  %40 = vmatprep.subr.mxu0 0.0
  %41 = vmatpush1.msra.mxu0 %v23
  %42 = vmatprep.subr.mxu0 0.0
  %43 = vmatpush1.msra.mxu0 %v24
  %44 = vmatprep.subr.mxu0 0.0
  %45 = vmatpush1.msra.mxu0 %v25
  %46 = vmatprep.subr.mxu0 0.0
  %47 = vmatpush1.msra.mxu0 %v26
  %48 = vmatprep.subr.mxu0 0.0
  %49 = vmatpush1.msra.mxu0 %v27
  %50 = vmatprep.subr.mxu0 0.0
  %51 = vmatpush1.msra.mxu0 %v28
  %52 = vmatprep.subr.mxu0 0.0
  %53 = vmatpush1.msra.mxu0 %v29
  %54 = vmatprep.subr.mxu0 0.0
  %55 = vmatpush1.msra.mxu0 %v30
  %56 = vmatprep.subr.mxu0 0.0
  %57 = vmatpush1.msra.mxu0 %v31
  %58 = vmatprep.subr.mxu0 0.0
  %59 = vmatpush1.msra.mxu0 %v32
  %60 = vmatprep.subr.mxu0 0.0
  %61 = vmatpush1.msra.mxu0 %v33
  %62 = vmatprep.subr.mxu0 0.0
  %63 = vmatpush1.msra.mxu0 %v34
  %64 = vmatprep.subr.mxu0 0.0
  %65 = vmatpush1.msra.mxu0 %v35
  %66 = vmatprep.subr.mxu0 0.0
  %67 = vmatpush1.msra.mxu0 %v36
  %68 = vmatprep.subr.mxu0 0.0
  %69 = vmatpush1.msra.mxu0 %v37
  %70 = vmatprep.subr.mxu0 0.0
  %71 = vmatpush1.msra.mxu0 0.0
  %72 = vmatprep.subr.mxu0 0.0
  %73 = vmatpush1.msra.mxu0 0.0
  %74 = vmatprep.subr.mxu0 0.0
  %75 = vmatpush1.msra.mxu0 0.0
  %76 = vmatprep.subr.mxu0 0.0
  %77 = vmatpush1.msra.mxu0 0.0
  %78 = vmatprep.subr.mxu0 0.0
  %79 = vmatpush1.msra.mxu0 0.0
  %80 = vmatprep.subr.mxu0 0.0
  %81 = vmatpush1.msra.mxu0 0.0
  %82 = vmatprep.subr.mxu0 0.0
  %83 = vmatpush1.msra.mxu0 0.0
  %84 = vmatprep.subr.mxu0 0.0
  %85 = vmatpush1.msra.mxu0 0.0
  %86 = vmatprep.subr.mxu0 0.0
  %87 = vmatpush1.msra.mxu0 0.0
  %88 = vmatprep.subr.mxu0 0.0
  %89 = vmatpush1.msra.mxu0 0.0
  %90 = vmatprep.subr.mxu0 0.0
  %91 = vmatpush1.msra.mxu0 0.0
  %92 = vmatprep.subr.mxu0 0.0
  %93 = vmatpush1.msra.mxu0 0.0
  %94 = vmatprep.subr.mxu0 0.0
  %95 = vmatpush1.msra.mxu0 0.0
  %96 = vmatprep.subr.mxu0 0.0
  %97 = vmatpush1.msra.mxu0 0.0
  %98 = vmatprep.subr.mxu0 0.0
  %99 = vmatpush1.msra.mxu0 0.0
  %100 = vmatprep.subr.mxu0 0.0
  %101 = vmatpush1.msra.mxu0 0.0
  %102 = vmatprep.mubr.f32.mxu0 0.0
  %103 = vmatmul.mubr.f32.gmra.mrb[0].mxu0 %v21
  %v104 = vpop.f32.mrb[0].mxu0
  %v105 = vadd.f32 0.0, %v104
  %v106 = vpop.f32.mrb[0].mxu0
  %107 = vdwg.mxu0
  %v108 = vadd.f32 %v20, %v105
  %109 = vst [vmem:[#allocation2] sm:$0x1] %v108
  // Predicated region
  $region18: #{gnn_rr_forward.3} parent=0 // pred_check
    %p110 = pneg %p15
  $region19: #{gnn_rr_forward.3} parent=0 // pred_check_branch
    %112 = sbr.rel (%p110) target = $region21
  $region20: #{gnn_rr_forward.3} parent=0 // pred_region
    %v113 = vld [vmem:[#allocation2] sm:$0x1]
    %s114 = sld [smem:[#allocation3]]
    %v115 = vstv %s114
    %v116 = vadd.f32 %v113, %v115
    %117 = vst [vmem:[%s3] sm:$0x1] %v116
  $region21: #{gnn_rr_forward.3} parent=0 // pred_fallthru
    _
  // Predicated region
  $region22: #{gnn_rr_forward.3} parent=0 // pred_check
    _
  $region23: #{gnn_rr_forward.3} parent=0 // pred_check_branch
    %119 = sbr.rel (0) target = $region25
  $region24: #{gnn_rr_forward.3} parent=0 // pred_region
    _
  $region25: #{gnn_rr_forward.3} parent=0 // pred_fallthru
    _
  // Predicated region
  $region26: #{gnn_rr_forward.3} parent=0 // pred_check
    _
  $region27: #{gnn_rr_forward.3} parent=0 // pred_check_branch
    %121 = sbr.rel (0) target = $region29
  $region28: #{gnn_rr_forward.3} parent=0 // pred_region
    _
  $region29: #{gnn_rr_forward.3} parent=0 // pred_fallthru
    _

</llo_original>
